<compile_context>
chip_gen: v7x
topology: tpu7x:2x2x1
jax: 0.10.0
libtpu: 0.0.40
codegen_flags: <defaults>
</compile_context>

<pallas_src>
import jax
import jax.numpy as jnp
from jax.experimental import pallas as pl
from jax.experimental.pallas import tpu as pltpu

LANE = 128


def _round_up(n, m=LANE):
    return ((n + m - 1) // m) * m


def dqn_kernel(x_ref, w1_ref, b1_ref, w2_ref, b2_ref, w3_ref, b3_ref, out_ref):
    # fc1 + ReLU: bf16 operands on the MXU, f32 accumulate / elementwise.
    x = x_ref[...].astype(jnp.bfloat16)
    h1 = jnp.dot(x, w1_ref[...], preferred_element_type=jnp.float32) + b1_ref[...]
    h1 = jnp.maximum(h1, 0.0).astype(jnp.bfloat16)      # single cast per layer
    # fc2 + ReLU
    h2 = jnp.dot(h1, w2_ref[...], preferred_element_type=jnp.float32) + b2_ref[...]
    h2 = jnp.maximum(h2, 0.0).astype(jnp.bfloat16)
    # out head (no activation); bf16 store halves writeback / vst pressure.
    q = jnp.dot(h2, w3_ref[...], preferred_element_type=jnp.float32) + b3_ref[...]
    out_ref[...] = q.astype(out_ref.dtype)


def pad_and_cast_params(w1, b1, w2, b2, w3, b3):
    """Zero-pad feature dims to multiples of 128; weights -> bf16, biases -> f32 (1, N).

    Zero padding is numerically exact through ReLU and the final affine."""
    h1p = _round_up(w1.shape[1])
    h2p = _round_up(w2.shape[1])
    ap = _round_up(w3.shape[1])

    def pad_w(w, in_p, out_p):
        i, o = w.shape
        wp = jnp.zeros((in_p, out_p), jnp.float32).at[:i, :o].set(w)
        return wp.astype(jnp.bfloat16)

    def pad_b(b, out_p):
        b = b.reshape(1, -1)
        return jnp.zeros((1, out_p), jnp.float32).at[:, : b.shape[1]].set(b)

    w1p = pad_w(w1, w1.shape[0], h1p)   # (S,   H1p)
    w2p = pad_w(w2, h1p, h2p)           # (H1p, H2p)
    w3p = pad_w(w3, h2p, ap)            # (H2p, Ap)
    return w1p, pad_b(b1, h1p), w2p, pad_b(b2, h2p), w3p, pad_b(b3, ap)


def dqn_forward(x, padded_params, *, block_b=None):
    """x: (B, state_size) f32.  Returns (B, Ap) bf16 Q-values (Ap = action_size
    padded to 128); real actions are columns [:action_size] (slice lazily)."""
    w1, b1, w2, b2, w3, b3 = padded_params
    B, S = x.shape
    H1, H2, Ap = w1.shape[1], w2.shape[1], w3.shape[1]

    if block_b is None:
        # One grid step for small/medium batches; 512-row steps (megacore
        # "parallel"-shardable) only for large replay batches.
        block_b = B if B <= 512 else 512

    grid = (pl.cdiv(B, block_b),)

    flops = 2 * B * (S * H1 + H1 * H2 + H2 * Ap)
    bytes_accessed = (
        x.size * 4
        + (w1.size + w2.size + w3.size) * 2
        + (b1.size + b2.size + b3.size) * 4
        + B * Ap * 2
    )

    out = pl.pallas_call(
        dqn_kernel,
        out_shape=jax.ShapeDtypeStruct((B, Ap), jnp.bfloat16),
        grid=grid,
        in_specs=[
            pl.BlockSpec((block_b, S), lambda i: (i, 0)),   # x tile moves with grid
            pl.BlockSpec((S, H1), lambda i: (0, 0)),        # weights stay resident
            pl.BlockSpec((1, H1), lambda i: (0, 0)),
            pl.BlockSpec((H1, H2), lambda i: (0, 0)),
            pl.BlockSpec((1, H2), lambda i: (0, 0)),
            pl.BlockSpec((H2, Ap), lambda i: (0, 0)),
            pl.BlockSpec((1, Ap), lambda i: (0, 0)),
        ],
        out_specs=pl.BlockSpec((block_b, Ap), lambda i: (i, 0)),
        compiler_params=pltpu.CompilerParams(
            dimension_semantics=("parallel",),
        ),
        cost_estimate=pl.CostEstimate(
            flops=flops, transcendentals=0, bytes_accessed=bytes_accessed
        ),
    )(x, w1, b1, w2, b2, w3, b3)

    return out


def init_params(key, state_size, action_size, fc1_size=64, fc2_size=64):
    """Deterministic init mimicking torch.nn.Linear default (uniform +/- 1/sqrt(fan_in)).
    Weights stored as (in_features, out_features) so the kernel computes x @ W + b."""
    ks = jax.random.split(key, 6)

    def lin(kw, kb, fan_in, fan_out):
        bound = 1.0 / jnp.sqrt(float(fan_in))
        w = jax.random.uniform(kw, (fan_in, fan_out), jnp.float32, -bound, bound)
        b = jax.random.uniform(kb, (1, fan_out), jnp.float32, -bound, bound)
        return w, b

    w1, b1 = lin(ks[0], ks[1], state_size, fc1_size)
    w2, b2 = lin(ks[2], ks[3], fc1_size, fc2_size)
    w3, b3 = lin(ks[4], ks[5], fc2_size, action_size)
    return w1, b1, w2, b2, w3, b3


def dqn_reference(x, w1, b1, w2, b2, w3, b3):
    """Pure-JAX reference with the same bf16-operand / f32-accumulate math."""
    def mm(a, w):
        return jnp.dot(a.astype(jnp.bfloat16), w.astype(jnp.bfloat16),
                       preferred_element_type=jnp.float32)

    h1 = jnp.maximum(mm(x, w1) + b1, 0.0)
    h2 = jnp.maximum(mm(h1, w2) + b2, 0.0)
    return mm(h2, w3) + b3


if __name__ == "__main__":
    key = jax.random.PRNGKey(0)
    k_in, k_par = jax.random.split(key)

    # LunarLander: state_size=8, action_size=4; typical replay minibatch of 64.
    B, state_size, action_size = 64, 8, 4
    x = jax.random.normal(k_in, (B, state_size), jnp.float32)

    params = init_params(k_par, state_size, action_size)
    padded = pad_and_cast_params(*params)

    q_padded = dqn_forward(x, padded)          # (B, 128) bf16, single grid step
    jax.block_until_ready(q_padded)

    q = q_padded[:, :action_size].astype(jnp.float32)   # lazy, exact slice
    ref = dqn_reference(x, *params)

    assert q.shape == (B, action_size)
    assert jnp.allclose(q, ref, atol=2e-2, rtol=2e-2), (
        float(jnp.max(jnp.abs(q - ref))))

    print("KERNEL_OK")
</pallas_src>

<mosaic_0001>
module attributes {stable_mosaic.version = 11 : i64} {
  func.func @dqn_kernel(%arg0: i32, %arg1: memref<64x8xf32, #tpu.memory_space<vmem>>, %arg2: memref<8x128xbf16, #tpu.memory_space<vmem>>, %arg3: memref<1x128xf32, #tpu.memory_space<vmem>>, %arg4: memref<128x128xbf16, #tpu.memory_space<vmem>>, %arg5: memref<1x128xf32, #tpu.memory_space<vmem>>, %arg6: memref<128x128xbf16, #tpu.memory_space<vmem>>, %arg7: memref<1x128xf32, #tpu.memory_space<vmem>>, %arg8: memref<64x128xbf16, #tpu.memory_space<vmem>>) attributes {dimension_semantics = [#tpu.dimension_semantics<parallel>], iteration_bounds = array<i64: 1>, scalar_prefetch = 0 : i64, scratch_operands = 0 : i64, tpu.core_type = #tpu.core_type<tc>, window_params = [{transform_indices = @transform_0, window_bounds = array<i64: 64, 8>}, {pipeline_mode = #tpu.pipeline_mode<synchronous>, transform_indices = @transform_1, window_bounds = array<i64: 8, 128>}, {pipeline_mode = #tpu.pipeline_mode<synchronous>, transform_indices = @transform_2, window_bounds = array<i64: 1, 128>}, {pipeline_mode = #tpu.pipeline_mode<synchronous>, transform_indices = @transform_3, window_bounds = array<i64: 128, 128>}, {pipeline_mode = #tpu.pipeline_mode<synchronous>, transform_indices = @transform_4, window_bounds = array<i64: 1, 128>}, {pipeline_mode = #tpu.pipeline_mode<synchronous>, transform_indices = @transform_5, window_bounds = array<i64: 128, 128>}, {pipeline_mode = #tpu.pipeline_mode<synchronous>, transform_indices = @transform_6, window_bounds = array<i64: 1, 128>}, {transform_indices = @transform_7, window_bounds = array<i64: 64, 128>}]} {
    %c0 = arith.constant 0 : index
    %c0_0 = arith.constant 0 : index
    %0 = vector.load %arg1[%c0, %c0_0] : memref<64x8xf32, #tpu.memory_space<vmem>>, vector<64x8xf32>
    %1 = arith.truncf %0 : vector<64x8xf32> to vector<64x8xbf16>
    %c0_1 = arith.constant 0 : index
    %c0_2 = arith.constant 0 : index
    %2 = vector.load %arg2[%c0_1, %c0_2] : memref<8x128xbf16, #tpu.memory_space<vmem>>, vector<8x128xbf16>
    %cst = arith.constant dense<0.000000e+00> : vector<64x128xf32>
    %3 = tpu.matmul %1, %2, %cst {dimension_numbers = #tpu.dot_dimension_numbers<[1], [0], [0], [1], [0, 0, 1, 1], [], []>} : vector<64x8xbf16>, vector<8x128xbf16>, vector<64x128xf32> -> vector<64x128xf32>
    %c0_3 = arith.constant 0 : index
    %c0_4 = arith.constant 0 : index
    %4 = vector.load %arg3[%c0_3, %c0_4] : memref<1x128xf32, #tpu.memory_space<vmem>>, vector<1x128xf32>
    %5 = vector.broadcast %4 : vector<1x128xf32> to vector<64x128xf32>
    %6 = arith.addf %3, %5 : vector<64x128xf32>
    %cst_5 = arith.constant 0.000000e+00 : f32
    %7 = vector.broadcast %cst_5 : f32 to vector<64x128xf32>
    %8 = arith.maximumf %6, %7 : vector<64x128xf32>
    %9 = arith.truncf %8 : vector<64x128xf32> to vector<64x128xbf16>
    %c0_6 = arith.constant 0 : index
    %c0_7 = arith.constant 0 : index
    %10 = vector.load %arg4[%c0_6, %c0_7] : memref<128x128xbf16, #tpu.memory_space<vmem>>, vector<128x128xbf16>
    %cst_8 = arith.constant dense<0.000000e+00> : vector<64x128xf32>
    %11 = tpu.matmul %9, %10, %cst_8 {dimension_numbers = #tpu.dot_dimension_numbers<[1], [0], [0], [1], [0, 0, 1, 1], [], []>} : vector<64x128xbf16>, vector<128x128xbf16>, vector<64x128xf32> -> vector<64x128xf32>
    %c0_9 = arith.constant 0 : index
    %c0_10 = arith.constant 0 : index
    %12 = vector.load %arg5[%c0_9, %c0_10] : memref<1x128xf32, #tpu.memory_space<vmem>>, vector<1x128xf32>
    %13 = vector.broadcast %12 : vector<1x128xf32> to vector<64x128xf32>
    %14 = arith.addf %11, %13 : vector<64x128xf32>
    %cst_11 = arith.constant 0.000000e+00 : f32
    %15 = vector.broadcast %cst_11 : f32 to vector<64x128xf32>
    %16 = arith.maximumf %14, %15 : vector<64x128xf32>
    %17 = arith.truncf %16 : vector<64x128xf32> to vector<64x128xbf16>
    %c0_12 = arith.constant 0 : index
    %c0_13 = arith.constant 0 : index
    %18 = vector.load %arg6[%c0_12, %c0_13] : memref<128x128xbf16, #tpu.memory_space<vmem>>, vector<128x128xbf16>
    %cst_14 = arith.constant dense<0.000000e+00> : vector<64x128xf32>
    %19 = tpu.matmul %17, %18, %cst_14 {dimension_numbers = #tpu.dot_dimension_numbers<[1], [0], [0], [1], [0, 0, 1, 1], [], []>} : vector<64x128xbf16>, vector<128x128xbf16>, vector<64x128xf32> -> vector<64x128xf32>
    %c0_15 = arith.constant 0 : index
    %c0_16 = arith.constant 0 : index
    %20 = vector.load %arg7[%c0_15, %c0_16] : memref<1x128xf32, #tpu.memory_space<vmem>>, vector<1x128xf32>
    %21 = vector.broadcast %20 : vector<1x128xf32> to vector<64x128xf32>
    %22 = arith.addf %19, %21 : vector<64x128xf32>
    %23 = arith.truncf %22 : vector<64x128xf32> to vector<64x128xbf16>
    %c0_17 = arith.constant 0 : index
    %c0_18 = arith.constant 0 : index
    %24 = vector.load %arg8[%c0_17, %c0_18] : memref<64x128xbf16, #tpu.memory_space<vmem>>, vector<64x128xbf16>
    tpu.vector_store %arg8[%c0_17, %c0_18], %23 {strides = array<i32>} : memref<64x128xbf16, #tpu.memory_space<vmem>>, vector<64x128xbf16>,
    return
  }
  func.func @transform_0(%arg0: i32) -> (i32, i32) {
    %c0_i32 = arith.constant 0 : i32
    %c0_i32_0 = arith.constant 0 : i32
    return %arg0, %c0_i32 : i32, i32
  }
  func.func @transform_1(%arg0: i32) -> (i32, i32) {
    %c0_i32 = arith.constant 0 : i32
    %c0_i32_0 = arith.constant 0 : i32
    %c0_i32_1 = arith.constant 0 : i32
    return %c0_i32, %c0_i32_0 : i32, i32
  }
  func.func @transform_2(%arg0: i32) -> (i32, i32) {
    %c0_i32 = arith.constant 0 : i32
    %c0_i32_0 = arith.constant 0 : i32
    %c0_i32_1 = arith.constant 0 : i32
    return %c0_i32, %c0_i32_0 : i32, i32
  }
  func.func @transform_3(%arg0: i32) -> (i32, i32) {
    %c0_i32 = arith.constant 0 : i32
    %c0_i32_0 = arith.constant 0 : i32
    %c0_i32_1 = arith.constant 0 : i32
    return %c0_i32, %c0_i32_0 : i32, i32
  }
  func.func @transform_4(%arg0: i32) -> (i32, i32) {
    %c0_i32 = arith.constant 0 : i32
    %c0_i32_0 = arith.constant 0 : i32
    %c0_i32_1 = arith.constant 0 : i32
    return %c0_i32, %c0_i32_0 : i32, i32
  }
  func.func @transform_5(%arg0: i32) -> (i32, i32) {
    %c0_i32 = arith.constant 0 : i32
    %c0_i32_0 = arith.constant 0 : i32
    %c0_i32_1 = arith.constant 0 : i32
    return %c0_i32, %c0_i32_0 : i32, i32
  }
  func.func @transform_6(%arg0: i32) -> (i32, i32) {
    %c0_i32 = arith.constant 0 : i32
    %c0_i32_0 = arith.constant 0 : i32
    %c0_i32_1 = arith.constant 0 : i32
    return %c0_i32, %c0_i32_0 : i32, i32
  }
  func.func @transform_7(%arg0: i32) -> (i32, i32) {
    %c0_i32 = arith.constant 0 : i32
    %c0_i32_0 = arith.constant 0 : i32
    return %arg0, %c0_i32 : i32, i32
  }
}

</mosaic_0001>

<llo_original>
// kernel: tpu_custom_call.1
$region0: #{tpu_custom_call.1}
  #allocation0 [shape = 'u32[]', space=smem, size = 0x4, offset = 0x4, fixed_abs, tag = 'smem constant byte address 0x4 - core index']
  #allocation1 [shape = 'u32[144,128]{1,0:T(1,128)}', space=vmem, size = 0x12000, scoped, tag = 'internal scratch']
  %s0 = inlined_call_operand.vmem [shape: f32[64,8], index: 0, kind: input, shape index: {}]
  %s1 = inlined_call_operand.vmem [shape: bf16[8,128], index: 1, kind: input, shape index: {}]
  %s2 = inlined_call_operand.vmem [shape: f32[1,128], index: 2, kind: input, shape index: {}]
  %s3 = inlined_call_operand.vmem [shape: bf16[128,128], index: 3, kind: input, shape index: {}]
  %s4 = inlined_call_operand.vmem [shape: f32[1,128], index: 4, kind: input, shape index: {}]
  %s5 = inlined_call_operand.hbm [shape: bf16[128,128], index: 5, kind: input, shape index: {}]
  %s6 = inlined_call_operand.vmem [shape: f32[1,128], index: 6, kind: input, shape index: {}]
  %s7 = inlined_call_operand.hbm [shape: bf16[64,128], index: 7, kind: output, shape index: {}]
  %s8 = sld [smem:[#allocation0]]
  $region42: #{tpu_custom_call.1} parent=0
    _
  %s10 = ssub.s32 1, %s8
  %s11 = scalar_select 0, %s10, %s8
  $region1: #{tpu_custom_call.1} parent=0
    #allocation2 [shape = 'u8[32768]{0}', space=vmem, size = 0x8000, scoped, tag = 'input window, operand 5, single buffered']
    #allocation3 [shape = 's32[1]{0}', space=sflag, size = 0x4, scoped, tag = 'scoped memory for tpu_custom_call.1']
    #allocation4 [shape = 's32[1]{0}', space=sflag, size = 0x4, scoped, tag = 'scoped memory for tpu_custom_call.1']
    #allocation5 [shape = 'u8[16384]{0}', space=vmem, size = 0x4000, scoped, tag = 'output window, operand 0, single buffered']
    %12 = vsyncpa [#allocation3], 0
    %13 = vsyncpa [#allocation4], 0
    // Predicated region
    $region2: #{tpu_custom_call.1} parent=1 // pred_check
      _
    $region3: #{tpu_custom_call.1} parent=1 // pred_check_branch
      %15 = sbr.rel (0) target = $region5
    $region4: #{tpu_custom_call.1} parent=1 // pred_region
      _
    $region5: #{tpu_custom_call.1} parent=1 // pred_fallthru
      _
    // Predicated region
    $region6: #{tpu_custom_call.1} parent=1 // pred_check
      _
    $region7: #{tpu_custom_call.1} parent=1 // pred_check_branch
      %17 = sbr.rel (0) target = $region9
    $region8: #{tpu_custom_call.1} parent=1 // pred_region
      _
    $region9: #{tpu_custom_call.1} parent=1 // pred_fallthru
      _
    // Predicated region
    $region10: #{tpu_custom_call.1} parent=1 // pred_check
      _
    $region11: #{tpu_custom_call.1} parent=1 // pred_check_branch
      %19 = sbr.rel (0) target = $region13
    $region12: #{tpu_custom_call.1} parent=1 // pred_region
      _
    $region13: #{tpu_custom_call.1} parent=1 // pred_fallthru
      _
    // Predicated region
    $region14: #{tpu_custom_call.1} parent=1 // pred_check
      _
    $region15: #{tpu_custom_call.1} parent=1 // pred_check_branch
      %21 = sbr.rel (0) target = $region17
    $region16: #{tpu_custom_call.1} parent=1 // pred_region
      _
    $region17: #{tpu_custom_call.1} parent=1 // pred_fallthru
      _
    // Predicated region
    $region18: #{tpu_custom_call.1} parent=1 // pred_check
      _
    $region19: #{tpu_custom_call.1} parent=1 // pred_check_branch
      %23 = sbr.rel (0) target = $region21
    $region20: #{tpu_custom_call.1} parent=1 // pred_region
      _
    $region21: #{tpu_custom_call.1} parent=1 // pred_fallthru
      _
    // Predicated region
    $region22: #{tpu_custom_call.1} parent=1 // pred_check
      _
    $region23: #{tpu_custom_call.1} parent=1 // pred_check_branch
      %25 = sbr.rel (0) target = $region25
    $region24: #{tpu_custom_call.1} parent=1 // pred_region
      %s27 = ssub.s32 1024, 1024
      %28 = vsyncadd [#allocation3], %s27
      %s29 = sshll.u32 [#allocation2], 4
      %s30 = int_to_ptr.vmem [resolvable:$true] %s29
      %35 = dma.hbm_to_vmem [thread:$0]  %s5, 1024, %s30, [#allocation3], 64, 64, 4
    $region25: #{tpu_custom_call.1} parent=1 // pred_fallthru
      _
    // Predicated region
    $region26: #{tpu_custom_call.1} parent=1 // pred_check
      _
    $region27: #{tpu_custom_call.1} parent=1 // pred_check_branch
      %37 = sbr.rel (0) target = $region29
    $region28: #{tpu_custom_call.1} parent=1 // pred_region
      _
    $region29: #{tpu_custom_call.1} parent=1 // pred_fallthru
      _
    // Predicated region
    $region30: #{tpu_custom_call.1} parent=1 // pred_check
      _
    $region31: #{tpu_custom_call.1} parent=1 // pred_check_branch
      %39 = sbr.rel (0) target = $region33
    $region32: #{tpu_custom_call.1} parent=1 // pred_region
      %40 = dma.done [#allocation3], 1024
    $region33: #{tpu_custom_call.1} parent=1 // pred_fallthru
      _
    %v42 = vld [vmem:[%s0] sm:$0xff]
    %v43 = vld [vmem:[%s0 + $0x8] sm:$0xff]
    %v44 = vld [vmem:[%s0 + $0x10] sm:$0xff]
    %v45 = vld [vmem:[%s0 + $0x18] sm:$0xff]
    %v46 = vld [vmem:[%s0 + $0x20] sm:$0xff]
    %v47 = vld [vmem:[%s0 + $0x28] sm:$0xff]
    %v48 = vld [vmem:[%s0 + $0x30] sm:$0xff]
    %v49 = vld [vmem:[%s0 + $0x38] sm:$0xff]
    %v50 = vpack.c.bf16 %v43, %v42
    %v51 = vpack.c.bf16 %v45, %v44
    %v52 = vpack.c.bf16 %v47, %v46
    %v53 = vpack.c.bf16 %v49, %v48
    %v54 = vld [vmem:[%s1] sm:$0xf]
    %v55 = vld [vmem:[%s2] sm:$0x1]
    %v57 = vlaneseq
    %v58 = vshrl.u32 %v57, 7
    %v59 = vsub.s32 0, %v58
    %v60 = vrot.slane %v55, %v59
    %vm62 = vcmask 64512
    %v64 = vsel %vm62, %v50, 0
    %v67 = vsel %vm62, %v51, 0
    %v70 = vsel %vm62, %v52, 0
    %v73 = vsel %vm62, %v53, 0
    %vm75 = vcmask 1043456
    %v77 = vsel %vm75, %v54, 0
    %79 = vmatprep.subr.bf16.mxu0 0
    %80 = vmatpush1.bf16.msra.mxu0 %v77
    %81 = vmatprep.subr.bf16.mxu0 0
    %82 = vmatpush1.bf16.msra.mxu0 0
    %83 = vmatprep.subr.bf16.mxu0 0
    %84 = vmatpush1.bf16.msra.mxu0 0
    %85 = vmatprep.subr.bf16.mxu0 0
    %86 = vmatpush1.bf16.msra.mxu0 0
    %87 = vmatprep.subr.bf16.mxu0 0
    %88 = vmatpush1.bf16.msra.mxu0 0
    %89 = vmatprep.subr.bf16.mxu0 0
    %90 = vmatpush1.bf16.msra.mxu0 0
    %91 = vmatprep.subr.bf16.mxu0 0
    %92 = vmatpush1.bf16.msra.mxu0 0
    %93 = vmatprep.subr.bf16.mxu0 0
    %94 = vmatpush1.bf16.msra.mxu0 0
    %95 = vmatprep.subr.bf16.mxu0 0
    %96 = vmatpush1.bf16.msra.mxu0 0
    %97 = vmatprep.subr.bf16.mxu0 0
    %98 = vmatpush1.bf16.msra.mxu0 0
    %99 = vmatprep.subr.bf16.mxu0 0
    %100 = vmatpush1.bf16.msra.mxu0 0
    %101 = vmatprep.subr.bf16.mxu0 0
    %102 = vmatpush1.bf16.msra.mxu0 0
    %103 = vmatprep.subr.bf16.mxu0 0
    %104 = vmatpush1.bf16.msra.mxu0 0
    %105 = vmatprep.subr.bf16.mxu0 0
    %106 = vmatpush1.bf16.msra.mxu0 0
    %107 = vmatprep.subr.bf16.mxu0 0
    %108 = vmatpush1.bf16.msra.mxu0 0
    %109 = vmatprep.subr.bf16.mxu0 0
    %110 = vmatpush1.bf16.msra.mxu0 0
    %111 = vmatprep.mubr.bf16.mxu0 0
    %112 = vmatmul.mubr.bf16.gmra.mrb[0].mxu0 %v64
    %v113 = vpop.f32.mrb[0].mxu0
    %v114 = vadd.f32 %v60, %v113
    %v115 = vpop.f32.mrb[0].mxu0
    %v116 = vpop.f32.mrb[0].mxu0
    %v117 = vadd.f32 %v60, %v116
    %v118 = vpop.f32.mrb[0].mxu0
    %119 = vmatprep.mubr.bf16.mxu0 0
    %120 = vmatmul.mubr.bf16.gmra.mrb[0].mxu0 %v67
    %v121 = vpop.f32.mrb[0].mxu0
    %v122 = vadd.f32 %v60, %v121
    %v123 = vpop.f32.mrb[0].mxu0
    %v124 = vpop.f32.mrb[0].mxu0
    %v125 = vadd.f32 %v60, %v124
    %v126 = vpop.f32.mrb[0].mxu0
    %127 = vmatprep.mubr.bf16.mxu0 0
    %128 = vmatmul.mubr.bf16.gmra.mrb[0].mxu0 %v70
    %v129 = vpop.f32.mrb[0].mxu0
    %v130 = vadd.f32 %v60, %v129
    %v131 = vpop.f32.mrb[0].mxu0
    %v132 = vpop.f32.mrb[0].mxu0
    %v133 = vadd.f32 %v60, %v132
    %v134 = vpop.f32.mrb[0].mxu0
    %135 = vmatprep.mubr.bf16.mxu0 0
    %136 = vmatmul.mubr.bf16.gmra.mrb[0].mxu0 %v73
    %v137 = vpop.f32.mrb[0].mxu0
    %v138 = vadd.f32 %v60, %v137
    %v139 = vpop.f32.mrb[0].mxu0
    %v140 = vpop.f32.mrb[0].mxu0
    %v141 = vadd.f32 %v60, %v140
    %v142 = vpop.f32.mrb[0].mxu0
    %143 = vdwg.mxu0
    %v144 = vmax.f32 %v114, 0.0
    %v145 = vmax.f32 %v117, 0.0
    %v146 = vmax.f32 %v122, 0.0
    %v147 = vmax.f32 %v125, 0.0
    %v148 = vmax.f32 %v130, 0.0
    %v149 = vmax.f32 %v133, 0.0
    %v150 = vmax.f32 %v138, 0.0
    %v151 = vmax.f32 %v141, 0.0
    %v152 = vpack.c.bf16 %v145, %v144
    %v153 = vpack.c.bf16 %v147, %v146
    %v154 = vpack.c.bf16 %v149, %v148
    %v155 = vpack.c.bf16 %v151, %v150
    %v156 = vld [vmem:[%s3] sm:$0xf]
    %v157 = vld [vmem:[%s3 + $0x4] sm:$0xf]
    %v158 = vld [vmem:[%s3 + $0x8] sm:$0xf]
    %v159 = vld [vmem:[%s3 + $0xc] sm:$0xf]
    %v160 = vld [vmem:[%s3 + $0x10] sm:$0xf]
    %v161 = vld [vmem:[%s3 + $0x14] sm:$0xf]
    %v162 = vld [vmem:[%s3 + $0x18] sm:$0xf]
    %v163 = vld [vmem:[%s3 + $0x1c] sm:$0xf]
    %v164 = vld [vmem:[%s3 + $0x20] sm:$0xf]
    %v165 = vld [vmem:[%s3 + $0x24] sm:$0xf]
    %v166 = vld [vmem:[%s3 + $0x28] sm:$0xf]
    %v167 = vld [vmem:[%s3 + $0x2c] sm:$0xf]
    %v168 = vld [vmem:[%s3 + $0x30] sm:$0xf]
    %v169 = vld [vmem:[%s3 + $0x34] sm:$0xf]
    %v170 = vld [vmem:[%s3 + $0x38] sm:$0xf]
    %v171 = vld [vmem:[%s3 + $0x3c] sm:$0xf]
    %v172 = vld [vmem:[%s4] sm:$0x1]
    %v174 = vlaneseq
    %v175 = vshrl.u32 %v174, 7
    %v176 = vsub.s32 0, %v175
    %v177 = vrot.slane %v172, %v176
    %v195 = vunpack.c.l.b16 %v156
    %v196 = vunpack.c.l.b16 %v157
    %v197 = vunpack.c.l.b16 %v158
    %v198 = vunpack.c.l.b16 %v159
    %v199 = vunpack.c.l.b16 %v160
    %v200 = vunpack.c.l.b16 %v161
    %v201 = vunpack.c.l.b16 %v162
    %v202 = vunpack.c.l.b16 %v163
    %v203 = vunpack.c.l.b16 %v164
    %v204 = vunpack.c.l.b16 %v165
    %v205 = vunpack.c.l.b16 %v166
    %v206 = vunpack.c.l.b16 %v167
    %v207 = vunpack.c.l.b16 %v168
    %v208 = vunpack.c.l.b16 %v169
    %v209 = vunpack.c.l.b16 %v170
    %v210 = vunpack.c.l.b16 %v171
    %v211 = vpack.c.b16 %v196, %v195
    %v212 = vpack.c.b16 %v198, %v197
    %v213 = vpack.c.b16 %v200, %v199
    %v214 = vpack.c.b16 %v202, %v201
    %v215 = vpack.c.b16 %v204, %v203
    %v216 = vpack.c.b16 %v206, %v205
    %v217 = vpack.c.b16 %v208, %v207
    %v218 = vpack.c.b16 %v210, %v209
    %227 = vmatprep.subr.bf16.mxu0 0
    %228 = vmatpush1.bf16.msra.mxu0 %v211
    %229 = vmatprep.subr.bf16.mxu0 0
    %230 = vmatpush1.bf16.msra.mxu0 %v212
    %231 = vmatprep.subr.bf16.mxu0 0
    %232 = vmatpush1.bf16.msra.mxu0 %v213
    %233 = vmatprep.subr.bf16.mxu0 0
    %234 = vmatpush1.bf16.msra.mxu0 %v214
    %235 = vmatprep.subr.bf16.mxu0 0
    %236 = vmatpush1.bf16.msra.mxu0 %v215
    %237 = vmatprep.subr.bf16.mxu0 0
    %238 = vmatpush1.bf16.msra.mxu0 %v216
    %239 = vmatprep.subr.bf16.mxu0 0
    %240 = vmatpush1.bf16.msra.mxu0 %v217
    %241 = vmatprep.subr.bf16.mxu0 0
    %242 = vmatpush1.bf16.msra.mxu0 %v218
    %243 = vmatprep.subr.bf16.mxu0 0
    %244 = vmatpush1.bf16.msra.mxu0 0
    %245 = vmatprep.subr.bf16.mxu0 0
    %246 = vmatpush1.bf16.msra.mxu0 0
    %247 = vmatprep.subr.bf16.mxu0 0
    %248 = vmatpush1.bf16.msra.mxu0 0
    %249 = vmatprep.subr.bf16.mxu0 0
    %250 = vmatpush1.bf16.msra.mxu0 0
    %251 = vmatprep.subr.bf16.mxu0 0
    %252 = vmatpush1.bf16.msra.mxu0 0
    %253 = vmatprep.subr.bf16.mxu0 0
    %254 = vmatpush1.bf16.msra.mxu0 0
    %255 = vmatprep.subr.bf16.mxu0 0
    %256 = vmatpush1.bf16.msra.mxu0 0
    %257 = vmatprep.subr.bf16.mxu0 0
    %258 = vmatpush1.bf16.msra.mxu0 0
    %259 = vmatprep.mubr.bf16.mxu0 0
    %260 = vmatmul.mubr.bf16.gmra.mrb[0].mxu0 %v152
    %v261 = vpop.f32.mrb[0].mxu0
    %v262 = vadd.f32 %v177, %v261
    %v263 = vpop.f32.mrb[0].mxu0
    %v264 = vpop.f32.mrb[0].mxu0
    %v265 = vadd.f32 %v177, %v264
    %v266 = vpop.f32.mrb[0].mxu0
    %267 = vmatprep.mubr.bf16.mxu0 0
    %268 = vmatmul.mubr.bf16.gmra.mrb[0].mxu0 %v153
    %v269 = vpop.f32.mrb[0].mxu0
    %v270 = vadd.f32 %v177, %v269
    %v271 = vpop.f32.mrb[0].mxu0
    %v272 = vpop.f32.mrb[0].mxu0
    %v273 = vadd.f32 %v177, %v272
    %v274 = vpop.f32.mrb[0].mxu0
    %275 = vmatprep.mubr.bf16.mxu0 0
    %276 = vmatmul.mubr.bf16.gmra.mrb[0].mxu0 %v154
    %v277 = vpop.f32.mrb[0].mxu0
    %v278 = vadd.f32 %v177, %v277
    %v279 = vpop.f32.mrb[0].mxu0
    %v280 = vpop.f32.mrb[0].mxu0
    %v281 = vadd.f32 %v177, %v280
    %v282 = vpop.f32.mrb[0].mxu0
    %283 = vmatprep.mubr.bf16.mxu0 0
    %284 = vmatmul.mubr.bf16.gmra.mrb[0].mxu0 %v155
    %v285 = vpop.f32.mrb[0].mxu0
    %v286 = vadd.f32 %v177, %v285
    %v287 = vpop.f32.mrb[0].mxu0
    %v288 = vpop.f32.mrb[0].mxu0
    %v289 = vadd.f32 %v177, %v288
    %v290 = vpop.f32.mrb[0].mxu0
    %291 = vdwg.mxu0
    %v292 = vmax.f32 %v262, 0.0
    %v293 = vmax.f32 %v265, 0.0
    %v294 = vmax.f32 %v270, 0.0
    %v295 = vmax.f32 %v273, 0.0
    %v296 = vmax.f32 %v278, 0.0
    %v297 = vmax.f32 %v281, 0.0
    %v298 = vmax.f32 %v286, 0.0
    %v299 = vmax.f32 %v289, 0.0
    %v300 = vpack.c.bf16 %v293, %v292
    %v301 = vpack.c.bf16 %v295, %v294
    %v302 = vpack.c.bf16 %v297, %v296
    %v303 = vpack.c.bf16 %v299, %v298
    %v304 = vld [vmem:[#allocation2] sm:$0xf]
    %v305 = vld [vmem:[#allocation2 + $0x4] sm:$0xf]
    %v306 = vld [vmem:[#allocation2 + $0x8] sm:$0xf]
    %v307 = vld [vmem:[#allocation2 + $0xc] sm:$0xf]
    %v308 = vld [vmem:[#allocation2 + $0x10] sm:$0xf]
    %v309 = vld [vmem:[#allocation2 + $0x14] sm:$0xf]
    %v310 = vld [vmem:[#allocation2 + $0x18] sm:$0xf]
    %v311 = vld [vmem:[#allocation2 + $0x1c] sm:$0xf]
    %v312 = vld [vmem:[#allocation2 + $0x20] sm:$0xf]
    %v313 = vld [vmem:[#allocation2 + $0x24] sm:$0xf]
    %v314 = vld [vmem:[#allocation2 + $0x28] sm:$0xf]
    %v315 = vld [vmem:[#allocation2 + $0x2c] sm:$0xf]
    %v316 = vld [vmem:[#allocation2 + $0x30] sm:$0xf]
    %v317 = vld [vmem:[#allocation2 + $0x34] sm:$0xf]
    %v318 = vld [vmem:[#allocation2 + $0x38] sm:$0xf]
    %v319 = vld [vmem:[#allocation2 + $0x3c] sm:$0xf]
    %v320 = vld [vmem:[%s6] sm:$0x1]
    %v322 = vlaneseq
    %v323 = vshrl.u32 %v322, 7
    %v324 = vsub.s32 0, %v323
    %v325 = vrot.slane %v320, %v324
    %v343 = vunpack.c.l.b16 %v304
    %v344 = vunpack.c.l.b16 %v305
    %v345 = vunpack.c.l.b16 %v306
    %v346 = vunpack.c.l.b16 %v307
    %v347 = vunpack.c.l.b16 %v308
    %v348 = vunpack.c.l.b16 %v309
    %v349 = vunpack.c.l.b16 %v310
    %v350 = vunpack.c.l.b16 %v311
    %v351 = vunpack.c.l.b16 %v312
    %v352 = vunpack.c.l.b16 %v313
    %v353 = vunpack.c.l.b16 %v314
    %v354 = vunpack.c.l.b16 %v315
    %v355 = vunpack.c.l.b16 %v316
    %v356 = vunpack.c.l.b16 %v317
    %v357 = vunpack.c.l.b16 %v318
    %v358 = vunpack.c.l.b16 %v319
    %v359 = vpack.c.b16 %v344, %v343
    %v360 = vpack.c.b16 %v346, %v345
    %v361 = vpack.c.b16 %v348, %v347
    %v362 = vpack.c.b16 %v350, %v349
    %v363 = vpack.c.b16 %v352, %v351
    %v364 = vpack.c.b16 %v354, %v353
    %v365 = vpack.c.b16 %v356, %v355
    %v366 = vpack.c.b16 %v358, %v357
    %375 = vmatprep.subr.bf16.mxu0 0
    %376 = vmatpush1.bf16.msra.mxu0 %v359
    %377 = vmatprep.subr.bf16.mxu0 0
    %378 = vmatpush1.bf16.msra.mxu0 %v360
    %379 = vmatprep.subr.bf16.mxu0 0
    %380 = vmatpush1.bf16.msra.mxu0 %v361
    %381 = vmatprep.subr.bf16.mxu0 0
    %382 = vmatpush1.bf16.msra.mxu0 %v362
    %383 = vmatprep.subr.bf16.mxu0 0
    %384 = vmatpush1.bf16.msra.mxu0 %v363
    %385 = vmatprep.subr.bf16.mxu0 0
    %386 = vmatpush1.bf16.msra.mxu0 %v364
    %387 = vmatprep.subr.bf16.mxu0 0
    %388 = vmatpush1.bf16.msra.mxu0 %v365
    %389 = vmatprep.subr.bf16.mxu0 0
    %390 = vmatpush1.bf16.msra.mxu0 %v366
    %391 = vmatprep.subr.bf16.mxu0 0
    %392 = vmatpush1.bf16.msra.mxu0 0
    %393 = vmatprep.subr.bf16.mxu0 0
    %394 = vmatpush1.bf16.msra.mxu0 0
    %395 = vmatprep.subr.bf16.mxu0 0
    %396 = vmatpush1.bf16.msra.mxu0 0
    %397 = vmatprep.subr.bf16.mxu0 0
    %398 = vmatpush1.bf16.msra.mxu0 0
    %399 = vmatprep.subr.bf16.mxu0 0
    %400 = vmatpush1.bf16.msra.mxu0 0
    %401 = vmatprep.subr.bf16.mxu0 0
    %402 = vmatpush1.bf16.msra.mxu0 0
    %403 = vmatprep.subr.bf16.mxu0 0
    %404 = vmatpush1.bf16.msra.mxu0 0
    %405 = vmatprep.subr.bf16.mxu0 0
    %406 = vmatpush1.bf16.msra.mxu0 0
    %407 = vmatprep.mubr.bf16.mxu0 0
    %408 = vmatmul.mubr.bf16.gmra.mrb[0].mxu0 %v300
    %v409 = vpop.f32.mrb[0].mxu0
    %v410 = vadd.f32 %v325, %v409
    %v411 = vpop.f32.mrb[0].mxu0
    %v412 = vpop.f32.mrb[0].mxu0
    %v413 = vadd.f32 %v325, %v412
    %v414 = vpop.f32.mrb[0].mxu0
    %415 = vmatprep.mubr.bf16.mxu0 0
    %416 = vmatmul.mubr.bf16.gmra.mrb[0].mxu0 %v301
    %v417 = vpop.f32.mrb[0].mxu0
    %v418 = vadd.f32 %v325, %v417
    %v419 = vpop.f32.mrb[0].mxu0
    %v420 = vpop.f32.mrb[0].mxu0
    %v421 = vadd.f32 %v325, %v420
    %v422 = vpop.f32.mrb[0].mxu0
    %423 = vmatprep.mubr.bf16.mxu0 0
    %424 = vmatmul.mubr.bf16.gmra.mrb[0].mxu0 %v302
    %v425 = vpop.f32.mrb[0].mxu0
    %v426 = vadd.f32 %v325, %v425
    %v427 = vpop.f32.mrb[0].mxu0
    %v428 = vpop.f32.mrb[0].mxu0
    %v429 = vadd.f32 %v325, %v428
    %v430 = vpop.f32.mrb[0].mxu0
    %431 = vmatprep.mubr.bf16.mxu0 0
    %432 = vmatmul.mubr.bf16.gmra.mrb[0].mxu0 %v303
    %v433 = vpop.f32.mrb[0].mxu0
    %v434 = vadd.f32 %v325, %v433
    %v435 = vpop.f32.mrb[0].mxu0
    %v436 = vpop.f32.mrb[0].mxu0
    %v437 = vadd.f32 %v325, %v436
    %v438 = vpop.f32.mrb[0].mxu0
    %439 = vdwg.mxu0
    %v440 = vpack.c.bf16 %v413, %v410
    %v441 = vpack.c.bf16 %v421, %v418
    %v442 = vpack.c.bf16 %v429, %v426
    %v443 = vpack.c.bf16 %v437, %v434
    %v448 = vunpack.c.l.b16 %v440
    %v449 = vunpack.c.h.b16 %v440
    %v450 = vunpack.c.l.b16 %v441
    %v451 = vunpack.c.h.b16 %v441
    %v452 = vunpack.c.l.b16 %v442
    %v453 = vunpack.c.h.b16 %v442
    %v454 = vunpack.c.l.b16 %v443
    %v455 = vunpack.c.h.b16 %v443
    %v456 = vpack.c.b16 %v448, %v448
    %v457 = vpack.c.b16 %v449, %v449
    %v458 = vpack.c.b16 %v450, %v450
    %v459 = vpack.c.b16 %v451, %v451
    %v460 = vpack.c.b16 %v452, %v452
    %v461 = vpack.c.b16 %v453, %v453
    %v462 = vpack.c.b16 %v454, %v454
    %v463 = vpack.c.b16 %v455, %v455
    %472 = vst [vmem:[#allocation5] sm:$0xf] %v456
    %473 = vst [vmem:[#allocation5 + $0x4] sm:$0xf] %v457
    %474 = vst [vmem:[#allocation5 + $0x8] sm:$0xf] %v458
    %475 = vst [vmem:[#allocation5 + $0xc] sm:$0xf] %v459
    %476 = vst [vmem:[#allocation5 + $0x10] sm:$0xf] %v460
    %477 = vst [vmem:[#allocation5 + $0x14] sm:$0xf] %v461
    %478 = vst [vmem:[#allocation5 + $0x18] sm:$0xf] %v462
    %479 = vst [vmem:[#allocation5 + $0x1c] sm:$0xf] %v463
    // Predicated region
    $region34: #{tpu_custom_call.1} parent=1 // pred_check
      _
    $region35: #{tpu_custom_call.1} parent=1 // pred_check_branch
      %481 = sbr.rel (0) target = $region37
    $region36: #{tpu_custom_call.1} parent=1 // pred_region
      %s483 = ssub.s32 512, 512
      %484 = vsyncadd [#allocation4], %s483
      %s485 = sshll.u32 [#allocation5], 4
      %s486 = int_to_ptr.vmem [resolvable:$true] %s485
      %491 = dma.vmem_to_hbm [thread:$0]  %s486, 512, %s7, [#allocation4], 64, 64, 4
    $region37: #{tpu_custom_call.1} parent=1 // pred_fallthru
      _
    // Predicated region
    $region38: #{tpu_custom_call.1} parent=1 // pred_check
      _
    $region39: #{tpu_custom_call.1} parent=1 // pred_check_branch
      %493 = sbr.rel (0) target = $region41
    $region40: #{tpu_custom_call.1} parent=1 // pred_region
      %494 = dma.done [#allocation4], 512
    $region41: #{tpu_custom_call.1} parent=1 // pred_fallthru
      _
    %495 = vsyncpa [#allocation3], 1
    %496 = vsyncpa [#allocation4], 1

</llo_original>
